<compile_context>
chip_gen: v6e
topology: v6e:2x2x1
jax: 0.10.0
libtpu: 0.0.40
codegen_flags: <defaults>
</compile_context>

<pallas_src>
import functools
import math

import jax
import jax.numpy as jnp
from jax.experimental import pallas as pl
from jax.experimental.pallas import tpu as pltpu


# ---------------------------------------------------------------------------
# Helpers
# ---------------------------------------------------------------------------

def _round_up(x, m):
    return ((x + m - 1) // m) * m


def _init_linear_raw(key, in_f, out_f):
    """PyTorch nn.Linear-style uniform init; weight stored as [in, out]."""
    kw, kb = jax.random.split(key)
    bound = 1.0 / math.sqrt(in_f)
    w = jax.random.uniform(kw, (in_f, out_f), jnp.float32, -bound, bound)
    b = jax.random.uniform(kb, (out_f,), jnp.float32, -bound, bound)
    return w, b


VMEM_LIMIT = 32 * 1024 * 1024  # safe on v5e/v6e (128 MiB) and v7x (64 MiB physical)


# ---------------------------------------------------------------------------
# Pallas kernels
# ---------------------------------------------------------------------------

def _linear_kernel(x_ref, w_ref, b_ref, o_ref, acc_ref, *, apply_relu):
    """One (Mp, TN) output tile of y = x @ W + b (bf16 inputs, f32 accumulation)."""
    k = pl.program_id(1)

    @pl.when(k == 0)
    def _():
        acc_ref[...] = jnp.zeros_like(acc_ref)

    acc_ref[...] += jnp.dot(
        x_ref[...], w_ref[...], preferred_element_type=jnp.float32
    )

    @pl.when(k == pl.num_programs(1) - 1)
    def _():
        y = acc_ref[...] + b_ref[...]
        if apply_relu:
            y = jnp.maximum(y, 0.0)
        o_ref[...] = y.astype(o_ref.dtype)


def _head_reparam_kernel(enc_ref, w_ref, b_ref, eps_ref, mu_ref, lv_ref, z_ref, *, lp):
    """Fused mu/log_var heads + clamp + reparameterization.

    w_ref is the concatenated [Lp, 2*Lp] head weight (mu | log_var)."""
    heads = (
        jnp.dot(enc_ref[...], w_ref[...], preferred_element_type=jnp.float32)
        + b_ref[...]
    )
    mu = heads[:, :lp]
    lv = jnp.clip(heads[:, lp:], -5.0, 5.0)          # torch.clamp(log_var, -5, 5)
    z = mu + eps_ref[...] * jnp.exp(0.5 * lv)
    mu_ref[...] = mu.astype(mu_ref.dtype)
    lv_ref[...] = lv.astype(lv_ref.dtype)
    z_ref[...] = z.astype(z_ref.dtype)


# ---------------------------------------------------------------------------
# Linear layer wrapper (weights pre-padded + bf16-cast once at init)
# ---------------------------------------------------------------------------

class LinearLayer:
    TN_TARGET = 512    # lane-dim tile (>=512 hits ~85% of HBM roofline per measurements)
    TK_TARGET = 1024   # contraction-dim tile (big contiguous weight DMA rows)

    def __init__(self, w, b):
        self.w, self.b = w, b                     # raw f32, kept for the reference check
        K, N = w.shape
        self.K, self.N = K, N

        Kp0 = _round_up(K, 128)
        Np0 = _round_up(N, 128)
        TK = min(self.TK_TARGET, Kp0)
        TN = min(self.TN_TARGET, Np0)
        # give the parallel N axis >= 2 blocks where possible so megacore can shard
        if Np0 // TN < 2 and TN % 256 == 0:
            TN //= 2
        self.TK, self.TN = TK, TN
        self.Kp = _round_up(Kp0, TK)
        self.Np = _round_up(Np0, TN)

        # one-time padding + bf16 cast (weights are streamed from HBM every forward)
        self.wp = jnp.pad(w, ((0, self.Kp - K), (0, self.Np - N))).astype(jnp.bfloat16)
        self.bp = jnp.pad(b, (0, self.Np - N)).reshape(1, self.Np).astype(jnp.float32)

    def __call__(self, x, *, relu):
        B = x.shape[0]
        Mp = max(8, _round_up(B, 8))
        xp = jnp.pad(x, ((0, Mp - B), (0, self.Kp - self.K))).astype(jnp.bfloat16)

        grid = (self.Np // self.TN, self.Kp // self.TK)   # (parallel N, reduction K)
        Mp_, TK, TN = Mp, self.TK, self.TN

        out = pl.pallas_call(
            functools.partial(_linear_kernel, apply_relu=relu),
            out_shape=jax.ShapeDtypeStruct((Mp, self.Np), jnp.float32),
            grid_spec=pltpu.PrefetchScalarGridSpec(
                num_scalar_prefetch=0,
                grid=grid,
                in_specs=[
                    pl.BlockSpec((Mp_, TK), lambda j, k: (0, k)),
                    pl.BlockSpec((TK, TN), lambda j, k: (k, j)),
                    pl.BlockSpec((1, TN), lambda j, k: (0, j)),
                ],
                out_specs=pl.BlockSpec((Mp_, TN), lambda j, k: (0, j)),
                scratch_shapes=[pltpu.VMEM((Mp_, TN), jnp.float32)],
            ),
            compiler_params=pltpu.CompilerParams(
                dimension_semantics=("parallel", "arbitrary"),
                vmem_limit_bytes=VMEM_LIMIT,
            ),
        )(xp, self.wp, self.bp)
        return out[:B, : self.N]


# ---------------------------------------------------------------------------
# Full model
# ---------------------------------------------------------------------------

class VAEWithClassifierPallas:
    def __init__(self, key, input_size, hidden_sizes, latent_dim, num_classes):
        self.input_size = input_size
        self.latent_dim = latent_dim
        self.num_classes = num_classes
        h1, h2, h3, h4 = hidden_sizes

        enc_dims = [(input_size, h1), (h1, h2), (h2, h3), (h3, h4), (h4, latent_dim)]
        dec_dims = [(latent_dim, h4), (h4, h3), (h3, h2), (h2, h1), (h1, input_size)]
        cls_dims = [(latent_dim, 128), (128, num_classes)]

        keys = jax.random.split(key, len(enc_dims) + len(dec_dims) + len(cls_dims) + 2)
        ki = iter(keys)

        self.enc = [LinearLayer(*_init_linear_raw(next(ki), i, o)) for i, o in enc_dims]
        self.dec = [LinearLayer(*_init_linear_raw(next(ki), i, o)) for i, o in dec_dims]
        self.cls = [LinearLayer(*_init_linear_raw(next(ki), i, o)) for i, o in cls_dims]

        # mu / log_var heads: concatenated into one [Lp, 2*Lp] weight for a fused kernel
        self.mu_w, self.mu_b = _init_linear_raw(next(ki), latent_dim, latent_dim)
        self.lv_w, self.lv_b = _init_linear_raw(next(ki), latent_dim, latent_dim)

        L = latent_dim
        Lp = _round_up(L, 128)
        self.Lp = Lp
        pad_w = lambda w: jnp.pad(w, ((0, Lp - L), (0, Lp - L)))
        pad_b = lambda b: jnp.pad(b, (0, Lp - L))
        self.head_w = jnp.concatenate(
            [pad_w(self.mu_w), pad_w(self.lv_w)], axis=1
        ).astype(jnp.bfloat16)                                   # [Lp, 2*Lp]
        self.head_b = jnp.concatenate(
            [pad_b(self.mu_b), pad_b(self.lv_b)]
        ).reshape(1, 2 * Lp).astype(jnp.float32)                 # [1, 2*Lp]

    # fused mu / log_var / clamp / reparameterize
    def _heads_and_reparam(self, encoded, eps):
        B = encoded.shape[0]
        L, Lp = self.latent_dim, self.Lp
        Mp = max(8, _round_up(B, 8))
        encp = jnp.pad(encoded, ((0, Mp - B), (0, Lp - L))).astype(jnp.bfloat16)
        epsp = jnp.pad(eps, ((0, Mp - B), (0, Lp - L))).astype(jnp.float32)

        full = lambda i: (0, 0)
        mu_p, lv_p, z_p = pl.pallas_call(
            functools.partial(_head_reparam_kernel, lp=Lp),
            out_shape=(
                jax.ShapeDtypeStruct((Mp, Lp), jnp.float32),
                jax.ShapeDtypeStruct((Mp, Lp), jnp.float32),
                jax.ShapeDtypeStruct((Mp, Lp), jnp.float32),
            ),
            grid_spec=pltpu.PrefetchScalarGridSpec(
                num_scalar_prefetch=0,
                grid=(1,),
                in_specs=[
                    pl.BlockSpec((Mp, Lp), full),
                    pl.BlockSpec((Lp, 2 * Lp), full),
                    pl.BlockSpec((1, 2 * Lp), full),
                    pl.BlockSpec((Mp, Lp), full),
                ],
                out_specs=[
                    pl.BlockSpec((Mp, Lp), full),
                    pl.BlockSpec((Mp, Lp), full),
                    pl.BlockSpec((Mp, Lp), full),
                ],
            ),
            compiler_params=pltpu.CompilerParams(vmem_limit_bytes=VMEM_LIMIT),
        )(encp, self.head_w, self.head_b, epsp)
        return mu_p[:B, :L], lv_p[:B, :L], z_p[:B, :L]

    def forward(self, x, eps):
        # encoder: every Linear followed by ReLU
        encoded = x
        for layer in self.enc:
            encoded = layer(encoded, relu=True)

        # fused mu / log_var / clamp(-5, 5) / reparameterize
        mu, log_var, z = self._heads_and_reparam(encoded, eps)

        # decoder: ReLU after every Linear except the last
        decoded = z
        for i, layer in enumerate(self.dec):
            decoded = layer(decoded, relu=(i < len(self.dec) - 1))

        # classifier: Linear -> ReLU -> Linear (operates on `encoded`)
        logits = encoded
        for i, layer in enumerate(self.cls):
            logits = layer(logits, relu=(i < len(self.cls) - 1))

        return encoded, decoded, mu, log_var, logits


# ---------------------------------------------------------------------------
# Main
# ---------------------------------------------------------------------------

if __name__ == "__main__":
    INPUT_SIZE = 200
    HIDDEN_SIZES = (432, 216, 108, 64)  # scaled-down stand-ins for 43201/21600/10800/4096
    LATENT_DIM = 32                     # scaled-down stand-in for 256
    NUM_CLASSES = 10
    BATCH = 2

    root = jax.random.PRNGKey(0)
    k_params, k_x, k_eps = jax.random.split(root, 3)

    model = VAEWithClassifierPallas(k_params, INPUT_SIZE, HIDDEN_SIZES, LATENT_DIM,
                                    NUM_CLASSES)
    x = jax.random.normal(k_x, (BATCH, INPUT_SIZE), dtype=jnp.float32)
    eps = jax.random.normal(k_eps, (BATCH, LATENT_DIM), dtype=jnp.float32)

    encoded, decoded, mu, log_var, logits = model.forward(x, eps)
    jax.block_until_ready((encoded, decoded, mu, log_var, logits))

    assert encoded.shape == (BATCH, LATENT_DIM)
    assert decoded.shape == (BATCH, INPUT_SIZE)
    assert mu.shape == (BATCH, LATENT_DIM)
    assert log_var.shape == (BATCH, LATENT_DIM)
    assert logits.shape == (BATCH, NUM_CLASSES)

    # Pure-JAX reference mirroring the kernel math (bf16 operands, f32 accumulation).
    def ref_linear(h, layer, relu):
        y = jnp.dot(h.astype(jnp.bfloat16), layer.w.astype(jnp.bfloat16),
                    preferred_element_type=jnp.float32) + layer.b
        return jnp.maximum(y, 0.0) if relu else y

    h = x
    for layer in model.enc:
        h = ref_linear(h, layer, True)
    hb = h.astype(jnp.bfloat16)
    mu_ref = jnp.dot(hb, model.mu_w.astype(jnp.bfloat16),
                     preferred_element_type=jnp.float32) + model.mu_b
    lv_ref = jnp.dot(hb, model.lv_w.astype(jnp.bfloat16),
                     preferred_element_type=jnp.float32) + model.lv_b
    lv_ref = jnp.clip(lv_ref, -5.0, 5.0)
    z_ref = mu_ref + eps * jnp.exp(0.5 * lv_ref)
    d = z_ref
    for i, layer in enumerate(model.dec):
        d = ref_linear(d, layer, i < len(model.dec) - 1)
    lg = h
    for i, layer in enumerate(model.cls):
        lg = ref_linear(lg, layer, i < len(model.cls) - 1)

    tol = dict(atol=1e-2, rtol=1e-2)
    assert jnp.allclose(encoded, h, **tol)
    assert jnp.allclose(mu, mu_ref, **tol)
    assert jnp.allclose(log_var, lv_ref, **tol)
    assert jnp.allclose(decoded, d, **tol)
    assert jnp.allclose(logits, lg, **tol)

    print("KERNEL_OK")
</pallas_src>

<mosaic_0001>
module attributes {stable_mosaic.version = 11 : i64} {
  func.func @_linear_kernel(%arg0: i32, %arg1: i32, %arg2: memref<8x256xbf16, #tpu.memory_space<vmem>>, %arg3: memref<256x256xbf16, #tpu.memory_space<vmem>>, %arg4: memref<1x256xf32, #tpu.memory_space<vmem>>, %arg5: memref<8x256xf32, #tpu.memory_space<vmem>>, %arg6: memref<8x256xf32, #tpu.memory_space<vmem>>) attributes {dimension_semantics = [#tpu.dimension_semantics<parallel>, #tpu.dimension_semantics<arbitrary>], iteration_bounds = array<i64: 2, 1>, scalar_prefetch = 0 : i64, scratch_operands = 1 : i64, tpu.core_type = #tpu.core_type<tc>, window_params = [{transform_indices = @transform_0, window_bounds = array<i64: 8, 256>}, {transform_indices = @transform_1, window_bounds = array<i64: 256, 256>}, {transform_indices = @transform_2, window_bounds = array<i64: 1, 256>}, {transform_indices = @transform_3, window_bounds = array<i64: 8, 256>}]} {
    %c0_i32 = arith.constant 0 : i32
    %0 = arith.cmpi eq, %arg1, %c0_i32 : i32
    %1 = arith.extui %0 : i1 to i32
    %c0_i32_0 = arith.constant 0 : i32
    %2 = arith.cmpi ne, %1, %c0_i32_0 : i32
    scf.if %2 {
      %cst_10 = arith.constant 0.000000e+00 : f32
      %12 = vector.broadcast %cst_10 : f32 to vector<8x256xf32>
      %c0_11 = arith.constant 0 : index
      %c0_12 = arith.constant 0 : index
      %13 = vector.load %arg6[%c0_11, %c0_12] : memref<8x256xf32, #tpu.memory_space<vmem>>, vector<8x256xf32>
      tpu.vector_store %arg6[%c0_11, %c0_12], %12 {strides = array<i32>} : memref<8x256xf32, #tpu.memory_space<vmem>>, vector<8x256xf32>,
    } else {
    }
    %c0 = arith.constant 0 : index
    %c0_1 = arith.constant 0 : index
    %3 = vector.load %arg6[%c0, %c0_1] : memref<8x256xf32, #tpu.memory_space<vmem>>, vector<8x256xf32>
    %c0_2 = arith.constant 0 : index
    %c0_3 = arith.constant 0 : index
    %4 = vector.load %arg2[%c0_2, %c0_3] : memref<8x256xbf16, #tpu.memory_space<vmem>>, vector<8x256xbf16>
    %c0_4 = arith.constant 0 : index
    %c0_5 = arith.constant 0 : index
    %5 = vector.load %arg3[%c0_4, %c0_5] : memref<256x256xbf16, #tpu.memory_space<vmem>>, vector<256x256xbf16>
    %cst = arith.constant dense<0.000000e+00> : vector<8x256xf32>
    %6 = tpu.matmul %4, %5, %cst {dimension_numbers = #tpu.dot_dimension_numbers<[1], [0], [0], [1], [0, 0, 1, 1], [], []>} : vector<8x256xbf16>, vector<256x256xbf16>, vector<8x256xf32> -> vector<8x256xf32>
    %7 = arith.addf %3, %6 : vector<8x256xf32>
    %c0_6 = arith.constant 0 : index
    %c0_7 = arith.constant 0 : index
    %8 = vector.load %arg6[%c0_6, %c0_7] : memref<8x256xf32, #tpu.memory_space<vmem>>, vector<8x256xf32>
    tpu.vector_store %arg6[%c0_6, %c0_7], %7 {strides = array<i32>} : memref<8x256xf32, #tpu.memory_space<vmem>>, vector<8x256xf32>,
    %c0_i32_8 = arith.constant 0 : i32
    %9 = arith.cmpi eq, %arg1, %c0_i32_8 : i32
    %10 = arith.extui %9 : i1 to i32
    %c0_i32_9 = arith.constant 0 : i32
    %11 = arith.cmpi ne, %10, %c0_i32_9 : i32
    scf.if %11 {
      %c0_10 = arith.constant 0 : index
      %c0_11 = arith.constant 0 : index
      %12 = vector.load %arg6[%c0_10, %c0_11] : memref<8x256xf32, #tpu.memory_space<vmem>>, vector<8x256xf32>
      %c0_12 = arith.constant 0 : index
      %c0_13 = arith.constant 0 : index
      %13 = vector.load %arg4[%c0_12, %c0_13] : memref<1x256xf32, #tpu.memory_space<vmem>>, vector<1x256xf32>
      %14 = vector.broadcast %13 : vector<1x256xf32> to vector<8x256xf32>
      %15 = arith.addf %12, %14 : vector<8x256xf32>
      %cst_14 = arith.constant 0.000000e+00 : f32
      %16 = vector.broadcast %cst_14 : f32 to vector<8x256xf32>
      %17 = arith.maximumf %15, %16 : vector<8x256xf32>
      %c0_15 = arith.constant 0 : index
      %c0_16 = arith.constant 0 : index
      %18 = vector.load %arg5[%c0_15, %c0_16] : memref<8x256xf32, #tpu.memory_space<vmem>>, vector<8x256xf32>
      tpu.vector_store %arg5[%c0_15, %c0_16], %17 {strides = array<i32>} : memref<8x256xf32, #tpu.memory_space<vmem>>, vector<8x256xf32>,
    } else {
    }
    return
  }
  func.func @transform_0(%arg0: i32, %arg1: i32) -> (i32, i32) {
    %c0_i32 = arith.constant 0 : i32
    %c0_i32_0 = arith.constant 0 : i32
    return %c0_i32, %arg1 : i32, i32
  }
  func.func @transform_1(%arg0: i32, %arg1: i32) -> (i32, i32) {
    %c0_i32 = arith.constant 0 : i32
    return %arg1, %arg0 : i32, i32
  }
  func.func @transform_2(%arg0: i32, %arg1: i32) -> (i32, i32) {
    %c0_i32 = arith.constant 0 : i32
    %c0_i32_0 = arith.constant 0 : i32
    return %c0_i32, %arg0 : i32, i32
  }
  func.func @transform_3(%arg0: i32, %arg1: i32) -> (i32, i32) {
    %c0_i32 = arith.constant 0 : i32
    %c0_i32_0 = arith.constant 0 : i32
    return %c0_i32, %arg0 : i32, i32
  }
}

</mosaic_0001>

<llo_original>
// kernel: tpu_custom_call.1
$region0: #{tpu_custom_call.1}
  #allocation0 [shape = 'u32[]', space=smem, size = 0x4, offset = 0x4, fixed_abs, tag = 'smem constant byte address 0x4 - core index']
  #allocation1 [shape = 'u32[144,128]{1,0:T(1,128)}', space=vmem, size = 0x12000, scoped, tag = 'internal scratch']
  #allocation2 [shape = 'f32[8,256]{1,0:T(8,128)}', space=vmem, size = 0x2000, scoped, tag = 'scratch operand']
  %s0 = inlined_call_operand.hbm [shape: bf16[8,256], index: 0, kind: input, shape index: {}]
  %s1 = inlined_call_operand.hbm [shape: bf16[256,512], index: 1, kind: input, shape index: {}]
  %s2 = inlined_call_operand.hbm [shape: f32[1,512], index: 2, kind: input, shape index: {}]
  %s3 = inlined_call_operand.hbm [shape: f32[8,512], index: 3, kind: output, shape index: {}]
  %s4 = sld [smem:[#allocation0]]
  $region65: #{tpu_custom_call.1} parent=0
    _
  %s6 = ssub.s32 1, %s4
  %s7 = scalar_select 0, %s6, %s4
  $region1: #{tpu_custom_call.1} parent=0
    #allocation3 [shape = 'u8[4096]{0}', space=vmem, size = 0x1000, scoped, tag = 'input window, operand 0, single buffered']
    #allocation4 [shape = 's32[2]{0}', space=sflag, size = 0x8, scoped, tag = 'scoped memory for tpu_custom_call.1']
    #allocation5 [shape = 's32[2]{0}', space=sflag, size = 0x8, scoped, tag = 'scoped memory for tpu_custom_call.1']
    #allocation6 [shape = 'u8[262144]{0}', space=vmem, size = 0x40000, scoped, tag = 'input window, operand 1']
    #allocation7 [shape = 's32[2]{0}', space=sflag, size = 0x8, scoped, tag = 'scoped memory for tpu_custom_call.1']
    #allocation8 [shape = 'u8[2048]{0}', space=vmem, size = 0x800, scoped, tag = 'input window, operand 2']
    #allocation9 [shape = 'u8[16384]{0}', space=vmem, size = 0x4000, scoped, tag = 'output window, operand 0']
    %8 = vsyncpa [#allocation4], 0
    %9 = vsyncpa [#allocation7], 0
    %s10 = scalar_lea.sflag [#allocation7], 1
    %11 = vsyncpa %s10, 0
    %12 = vsyncpa [#allocation5], 0
    %s13 = scalar_lea.sflag [#allocation5], 1
    %14 = vsyncpa %s13, 0
    loop: start=0, step=1, limit=4
    $region2: #{tpu_custom_call.1} parent=1 // loop_pre_header
      _
    $region3: #{tpu_custom_call.1} parent=1 // loop_header
      %s16 = sphi 0, %s20
      %p17 = scmp.ge.s32.totalorder %s16, 4
      %s23 = sphi 0, %s35
      %s24 = sphi 0, %s31
      %s25 = sphi 0, %s23
      %s26 = sphi 0, %s24
      %s27 = sphi 0, %s25
      %s28 = sphi 0, %s26
      %s38 = sphi 0, %s40
      %s41 = sphi 0, %s38
      %s42 = sphi 0, %s41
      %s58 = sphi 0, %s42
      %s66 = sphi 0, %s68
      %s69 = sphi 0, %s66
      %s70 = sphi 0, %s69
      %s86 = sphi 0, %s70
      %s92 = sphi 0, %s94
      %s95 = sphi 0, %s92
      %s96 = sphi 0, %s95
      %s112 = sphi 0, %s96
      %s118 = sphi 0, %s120
      %s121 = sphi 0, %s118
      %s122 = sphi 0, %s121
      %s138 = sphi 0, %s122
    $region4: #{tpu_custom_call.1} parent=1 // loop_header_branch
      %19 = sbr.rel (%p17) target = $region8
    $region5: #{tpu_custom_call.1} parent=1 // loop_body
      %s21 = ssub.s32 %s16, 1
      %s22 = ssub.s32 %s16, 2
      %s29 = sadd.s32 1, %s24
      %p30 = scmp.ge.s32.totalorder %s29, 1
      %s31 = scalar_select %p30, 0, %s29
      %s32 = sadd.s32 1, %s23
      %s33 = scalar_select %p30, %s32, %s23
      %p34 = scmp.ge.s32.totalorder %s33, 2
      %s35 = scalar_select %p34, 0, %s33
      %s36 = ssub.s32 %s24, %s31
      %p37 = scmp.eq.s32.totalorder %s36, 0
      %s39 = sadd.s32 %s38, 1
      %s40 = scalar_select %p37, %s38, %s39
      %p43 = pneg %p37
      %p44 = scmp.eq.s32.totalorder %s16, 1
      %p45 = por %p43, %p44
      %p46 = scmp.ne.s32.totalorder %s38, %s41
      %p47 = scmp.eq.s32.totalorder %s16, 0
      %p48 = por %p46, %p47
      %p49 = scmp.ne.s32.totalorder %s38, %s41
      %p50 = scmp.eq.s32.totalorder %s21, 1
      %p51 = por %p49, %p50
      %p52 = scmp.ne.s32.totalorder %s41, %s42
      %p53 = scmp.eq.s32.totalorder %s21, 0
      %p54 = por %p52, %p53
      %p55 = scmp.ne.s32.totalorder %s41, %s42
      %p56 = scmp.eq.s32.totalorder %s22, 1
      %p57 = por %p55, %p56
      %p59 = scmp.ne.s32.totalorder %s42, %s58
      %p60 = scmp.eq.s32.totalorder %s22, 0
      %p61 = por %p59, %p60
      %s62 = ssub.s32 %s24, %s31
      %s63 = ssub.s32 %s23, %s35
      %s64 = sor.u32 %s62, %s63
      %p65 = scmp.eq.s32.totalorder %s64, 0
      %s67 = sadd.s32 %s66, 1
      %s68 = scalar_select %p65, %s66, %s67
      %p71 = pneg %p65
      %p72 = scmp.eq.s32.totalorder %s16, 1
      %p73 = por %p71, %p72
      %p74 = scmp.ne.s32.totalorder %s66, %s69
      %p75 = scmp.eq.s32.totalorder %s16, 0
      %p76 = por %p74, %p75
      %p77 = scmp.ne.s32.totalorder %s66, %s69
      %p78 = scmp.eq.s32.totalorder %s21, 1
      %p79 = por %p77, %p78
      %p80 = scmp.ne.s32.totalorder %s69, %s70
      %p81 = scmp.eq.s32.totalorder %s21, 0
      %p82 = por %p80, %p81
      %p83 = scmp.ne.s32.totalorder %s69, %s70
      %p84 = scmp.eq.s32.totalorder %s22, 1
      %p85 = por %p83, %p84
      %p87 = scmp.ne.s32.totalorder %s70, %s86
      %p88 = scmp.eq.s32.totalorder %s22, 0
      %p89 = por %p87, %p88
      %s90 = ssub.s32 %s23, %s35
      %p91 = scmp.eq.s32.totalorder %s90, 0
      %s93 = sadd.s32 %s92, 1
      %s94 = scalar_select %p91, %s92, %s93
      %p97 = pneg %p91
      %p98 = scmp.eq.s32.totalorder %s16, 1
      %p99 = por %p97, %p98
      %p100 = scmp.ne.s32.totalorder %s92, %s95
      %p101 = scmp.eq.s32.totalorder %s16, 0
      %p102 = por %p100, %p101
      %p103 = scmp.ne.s32.totalorder %s92, %s95
      %p104 = scmp.eq.s32.totalorder %s21, 1
      %p105 = por %p103, %p104
      %p106 = scmp.ne.s32.totalorder %s95, %s96
      %p107 = scmp.eq.s32.totalorder %s21, 0
      %p108 = por %p106, %p107
      %p109 = scmp.ne.s32.totalorder %s95, %s96
      %p110 = scmp.eq.s32.totalorder %s22, 1
      %p111 = por %p109, %p110
      %p113 = scmp.ne.s32.totalorder %s96, %s112
      %p114 = scmp.eq.s32.totalorder %s22, 0
      %p115 = por %p113, %p114
      %s116 = ssub.s32 %s23, %s35
      %p117 = scmp.eq.s32.totalorder %s116, 0
      %s119 = sadd.s32 %s118, 1
      %s120 = scalar_select %p117, %s118, %s119
      %p123 = pneg %p117
      %p124 = scmp.eq.s32.totalorder %s16, 1
      %p125 = por %p123, %p124
      %p126 = scmp.ne.s32.totalorder %s118, %s121
      %p127 = scmp.eq.s32.totalorder %s16, 0
      %p128 = por %p126, %p127
      %p129 = scmp.ne.s32.totalorder %s118, %s121
      %p130 = scmp.eq.s32.totalorder %s21, 1
      %p131 = por %p129, %p130
      %p132 = scmp.ne.s32.totalorder %s121, %s122
      %p133 = scmp.eq.s32.totalorder %s21, 0
      %p134 = por %p132, %p133
      %p135 = scmp.ne.s32.totalorder %s121, %s122
      %p136 = scmp.eq.s32.totalorder %s22, 1
      %p137 = por %p135, %p136
      %p139 = scmp.ne.s32.totalorder %s122, %s138
      %p140 = scmp.eq.s32.totalorder %s22, 0
      %p141 = por %p139, %p140
      %p142 = scmp.le.s32.totalorder 1, %s16
      %p143 = scmp.lt.s32.totalorder %s16, 3
      %p144 = pnand %p142, %p143
      %p145 = pneg %p144
      // Predicated region
      $region9: #{tpu_custom_call.1} parent=5 // pred_check
        _
      $region10: #{tpu_custom_call.1} parent=5 // pred_check_branch
        %147 = sbr.rel (%p144) target = $region12
      $region11: #{tpu_custom_call.1} parent=5 // pred_region
        %s148 = ssub.s32 %s16, 1
        // Predicated region
        $region13: #{tpu_custom_call.1} parent=11 // pred_check
          %p149 = pneg %p54
        $region14: #{tpu_custom_call.1} parent=11 // pred_check_branch
          %151 = sbr.rel (%p149) target = $region16
        $region15: #{tpu_custom_call.1} parent=11 // pred_region
          %s152 = smul.u32 2, %s26
          %s154 = ssub.s32 128, 128
          %155 = vsyncadd [#allocation4], %s154
          %s156 = smul.addr %s152, 64
          %s157 = scalar_lea.hbm %s0, %s156
          %s159 = sshll.u32 [#allocation3], 4
          %s160 = int_to_ptr.vmem [resolvable:$true] %s159
          %162 = dma.hbm_to_vmem [thread:$0]  %s157, 128, %s160, [#allocation4]
        $region16: #{tpu_custom_call.1} parent=11 // pred_fallthru
          _
      $region12: #{tpu_custom_call.1} parent=5 // pred_fallthru
        _
      %p163 = scmp.lt.s32.totalorder %s16, 2
      // Predicated region
      $region17: #{tpu_custom_call.1} parent=5 // pred_check
        %p164 = pneg %p163
      $region18: #{tpu_custom_call.1} parent=5 // pred_check_branch
        %166 = sbr.rel (%p164) target = $region20
      $region19: #{tpu_custom_call.1} parent=5 // pred_region
        // Predicated region
        $region21: #{tpu_custom_call.1} parent=19 // pred_check
          %p167 = pneg %p76
        $region22: #{tpu_custom_call.1} parent=19 // pred_check_branch
          %169 = sbr.rel (%p167) target = $region24
        $region23: #{tpu_custom_call.1} parent=19 // pred_region
          %s170 = sand.u32 %s16, 1
          %s171 = scalar_lea.sflag [#allocation7], %s170
          %s172 = sand.u32 %s66, 1
          %s173 = smul.addr %s172, 256
          %s174 = scalar_lea.vmem [#allocation6], %s173
          %s175 = smul.u32 32, %s24
          %s176 = smul.u32 2, %s23
          %s178 = ssub.s32 4096, 4096
          %179 = vsyncadd %s171, %s178
          %s180 = smul.addr %s175, 4
          %s181 = sadd.s32 %s176, %s180
          %s182 = smul.addr %s181, 64
          %s183 = scalar_lea.hbm %s1, %s182
          %s184 = sshll.u32 %s174, 4
          %s185 = int_to_ptr.vmem [resolvable:$true] %s184
          %190 = dma.hbm_to_vmem [thread:$0]  %s183, 4096, %s185, %s171, 256, 128, 8
        $region24: #{tpu_custom_call.1} parent=19 // pred_fallthru
          _
        // Predicated region
        $region25: #{tpu_custom_call.1} parent=19 // pred_check
          %p191 = pneg %p102
        $region26: #{tpu_custom_call.1} parent=19 // pred_check_branch
          %193 = sbr.rel (%p191) target = $region28
        $region27: #{tpu_custom_call.1} parent=19 // pred_region
          %s194 = sand.u32 %s16, 1
          %s195 = scalar_lea.sflag [#allocation7], %s194
          %s196 = sand.u32 %s92, 1
          %s197 = smul.addr %s196, 2
          %s198 = scalar_lea.vmem [#allocation8], %s197
          %s199 = smul.u32 2, %s23
          %s201 = ssub.s32 32, 32
          %202 = vsyncadd %s195, %s201
          %s203 = smul.addr %s199, 16
          %s204 = scalar_lea.hbm %s2, %s203
          %s206 = sshll.u32 %s198, 4
          %s207 = int_to_ptr.vmem [resolvable:$true] %s206
          %209 = dma.hbm_to_vmem [thread:$0]  %s204, 32, %s207, %s195
        $region28: #{tpu_custom_call.1} parent=19 // pred_fallthru
          _
      $region20: #{tpu_custom_call.1} parent=5 // pred_fallthru
        _
      %p210 = scmp.le.s32.totalorder 1, %s16
      %p211 = scmp.lt.s32.totalorder %s16, 3
      %p212 = pnand %p210, %p211
      %p213 = pneg %p212
      // Predicated region
      $region29: #{tpu_custom_call.1} parent=5 // pred_check
        _
      $region30: #{tpu_custom_call.1} parent=5 // pred_check_branch
        %215 = sbr.rel (%p212) target = $region32
      $region31: #{tpu_custom_call.1} parent=5 // pred_region
        %s216 = ssub.s32 %s16, 1
        // Predicated region
        $region33: #{tpu_custom_call.1} parent=31 // pred_check
          %p217 = pneg %p54
        $region34: #{tpu_custom_call.1} parent=31 // pred_check_branch
          %219 = sbr.rel (%p217) target = $region36
        $region35: #{tpu_custom_call.1} parent=31 // pred_region
          %220 = dma.done [#allocation4], 128
        $region36: #{tpu_custom_call.1} parent=31 // pred_fallthru
          _
        %s221 = sand.u32 %s21, 1
        %s222 = scalar_lea.sflag [#allocation7], %s221
        %s223 = sand.u32 %s69, 1
        %s224 = smul.addr %s223, 256
        %s225 = scalar_lea.vmem [#allocation6], %s224
        // Predicated region
        $region37: #{tpu_custom_call.1} parent=31 // pred_check
          %p226 = pneg %p82
        $region38: #{tpu_custom_call.1} parent=31 // pred_check_branch
          %228 = sbr.rel (%p226) target = $region40
        $region39: #{tpu_custom_call.1} parent=31 // pred_region
          %229 = dma.done %s222, 4096
        $region40: #{tpu_custom_call.1} parent=31 // pred_fallthru
          _
        %s230 = sand.u32 %s21, 1
        %s231 = scalar_lea.sflag [#allocation7], %s230
        %s232 = sand.u32 %s95, 1
        %s233 = smul.addr %s232, 2
        %s234 = scalar_lea.vmem [#allocation8], %s233
        // Predicated region
        $region41: #{tpu_custom_call.1} parent=31 // pred_check
          %p235 = pneg %p108
        $region42: #{tpu_custom_call.1} parent=31 // pred_check_branch
          %237 = sbr.rel (%p235) target = $region44
        $region43: #{tpu_custom_call.1} parent=31 // pred_region
          %238 = dma.done %s231, 32
        $region44: #{tpu_custom_call.1} parent=31 // pred_fallthru
          _
        %p239 = pneg %p54
        %p240 = pneg %p51
        %s241 = sand.u32 %s21, 1
        %s242 = scalar_lea.sflag [#allocation7], %s241
        %s243 = sand.u32 %s69, 1
        %s244 = smul.addr %s243, 256
        %s245 = scalar_lea.vmem [#allocation6], %s244
        %p246 = pneg %p82
        %p247 = pneg %p79
        %s248 = sand.u32 %s21, 1
        %s249 = scalar_lea.sflag [#allocation7], %s248
        %s250 = sand.u32 %s95, 1
        %s251 = smul.addr %s250, 2
        %s252 = scalar_lea.vmem [#allocation8], %s251
        %p253 = pneg %p108
        %p254 = pneg %p105
        %p255 = pneg %p134
        %p256 = pneg %p131
        %s257 = sand.u32 %s121, 1
        %s258 = scalar_lea.sflag [#allocation5], %s257
        %s259 = sand.u32 %s121, 1
        %s260 = smul.addr %s259, 16
        %s261 = scalar_lea.vmem [#allocation9], %s260
        %s262 = smul.u32 2, %s26
        %s263 = smul.u32 32, %s26
        %s264 = smul.u32 2, %s25
        %s265 = smul.u32 2, %s25
        %s266 = smul.u32 2, %s25
        %p267 = scmp.eq.s32.totalorder %s26, 0
        // Predicated region
        $region45: #{tpu_custom_call.1} parent=31 // pred_check
          %p268 = pneg %p267
        $region46: #{tpu_custom_call.1} parent=31 // pred_check_branch
          %270 = sbr.rel (%p268) target = $region48
        $region47: #{tpu_custom_call.1} parent=31 // pred_region
          %271 = vst [vmem:[#allocation2] sm:$0xff] 0.0
          %272 = vst [vmem:[#allocation2 + $0x8] sm:$0xff] 0.0
        $region48: #{tpu_custom_call.1} parent=31 // pred_fallthru
          _
        %v273 = vld [vmem:[#allocation2] sm:$0xff]
        %v274 = vld [vmem:[#allocation2 + $0x8] sm:$0xff]
        %v275 = vld [vmem:[#allocation3] sm:$0xff]
        %v276 = vld [vmem:[%s225] sm:$0xff]
        %v277 = vld [vmem:[%s225 + $0x8] sm:$0xff]
        %v278 = vld [vmem:[%s225 + $0x10] sm:$0xff]
        %v279 = vld [vmem:[%s225 + $0x18] sm:$0xff]
        %v280 = vld [vmem:[%s225 + $0x20] sm:$0xff]
        %v281 = vld [vmem:[%s225 + $0x28] sm:$0xff]
        %v282 = vld [vmem:[%s225 + $0x30] sm:$0xff]
        %v283 = vld [vmem:[%s225 + $0x38] sm:$0xff]
        %v284 = vld [vmem:[%s225 + $0x40] sm:$0xff]
        %v285 = vld [vmem:[%s225 + $0x48] sm:$0xff]
        %v286 = vld [vmem:[%s225 + $0x50] sm:$0xff]
        %v287 = vld [vmem:[%s225 + $0x58] sm:$0xff]
        %v288 = vld [vmem:[%s225 + $0x60] sm:$0xff]
        %v289 = vld [vmem:[%s225 + $0x68] sm:$0xff]
        %v290 = vld [vmem:[%s225 + $0x70] sm:$0xff]
        %v291 = vld [vmem:[%s225 + $0x78] sm:$0xff]
        %v292 = vld [vmem:[%s225 + $0x80] sm:$0xff]
        %v293 = vld [vmem:[%s225 + $0x88] sm:$0xff]
        %v294 = vld [vmem:[%s225 + $0x90] sm:$0xff]
        %v295 = vld [vmem:[%s225 + $0x98] sm:$0xff]
        %v296 = vld [vmem:[%s225 + $0xa0] sm:$0xff]
        %v297 = vld [vmem:[%s225 + $0xa8] sm:$0xff]
        %v298 = vld [vmem:[%s225 + $0xb0] sm:$0xff]
        %v299 = vld [vmem:[%s225 + $0xb8] sm:$0xff]
        %v300 = vld [vmem:[%s225 + $0xc0] sm:$0xff]
        %v301 = vld [vmem:[%s225 + $0xc8] sm:$0xff]
        %v302 = vld [vmem:[%s225 + $0xd0] sm:$0xff]
        %v303 = vld [vmem:[%s225 + $0xd8] sm:$0xff]
        %v304 = vld [vmem:[%s225 + $0xe0] sm:$0xff]
        %v305 = vld [vmem:[%s225 + $0xe8] sm:$0xff]
        %v306 = vld [vmem:[%s225 + $0xf0] sm:$0xff]
        %v307 = vld [vmem:[%s225 + $0xf8] sm:$0xff]
        %v309 = vunpack.c.l.b16 %v275
        %v310 = vunpack.c.h.b16 %v275
        %v311 = vpack.c.b16 %v309, %v309
        %v312 = vpack.c.b16 %v310, %v310
        %v347 = vunpack.c.l.b16 %v276
        %v348 = vunpack.c.h.b16 %v276
        %v349 = vunpack.c.l.b16 %v277
        %v350 = vunpack.c.h.b16 %v277
        %v351 = vunpack.c.l.b16 %v278
        %v352 = vunpack.c.h.b16 %v278
        %v353 = vunpack.c.l.b16 %v279
        %v354 = vunpack.c.h.b16 %v279
        %v355 = vunpack.c.l.b16 %v280
        %v356 = vunpack.c.h.b16 %v280
        %v357 = vunpack.c.l.b16 %v281
        %v358 = vunpack.c.h.b16 %v281
        %v359 = vunpack.c.l.b16 %v282
        %v360 = vunpack.c.h.b16 %v282
        %v361 = vunpack.c.l.b16 %v283
        %v362 = vunpack.c.h.b16 %v283
        %v363 = vunpack.c.l.b16 %v284
        %v364 = vunpack.c.h.b16 %v284
        %v365 = vunpack.c.l.b16 %v285
        %v366 = vunpack.c.h.b16 %v285
        %v367 = vunpack.c.l.b16 %v286
        %v368 = vunpack.c.h.b16 %v286
        %v369 = vunpack.c.l.b16 %v287
        %v370 = vunpack.c.h.b16 %v287
        %v371 = vunpack.c.l.b16 %v288
        %v372 = vunpack.c.h.b16 %v288
        %v373 = vunpack.c.l.b16 %v289
        %v374 = vunpack.c.h.b16 %v289
        %v375 = vunpack.c.l.b16 %v290
        %v376 = vunpack.c.h.b16 %v290
        %v377 = vunpack.c.l.b16 %v291
        %v378 = vunpack.c.h.b16 %v291
        %v379 = vunpack.c.l.b16 %v292
        %v380 = vunpack.c.h.b16 %v292
        %v381 = vunpack.c.l.b16 %v293
        %v382 = vunpack.c.h.b16 %v293
        %v383 = vunpack.c.l.b16 %v294
        %v384 = vunpack.c.h.b16 %v294
        %v385 = vunpack.c.l.b16 %v295
        %v386 = vunpack.c.h.b16 %v295
        %v387 = vunpack.c.l.b16 %v296
        %v388 = vunpack.c.h.b16 %v296
        %v389 = vunpack.c.l.b16 %v297
        %v390 = vunpack.c.h.b16 %v297
        %v391 = vunpack.c.l.b16 %v298
        %v392 = vunpack.c.h.b16 %v298
        %v393 = vunpack.c.l.b16 %v299
        %v394 = vunpack.c.h.b16 %v299
        %v395 = vunpack.c.l.b16 %v300
        %v396 = vunpack.c.h.b16 %v300
        %v397 = vunpack.c.l.b16 %v301
        %v398 = vunpack.c.h.b16 %v301
        %v399 = vunpack.c.l.b16 %v302
        %v400 = vunpack.c.h.b16 %v302
        %v401 = vunpack.c.l.b16 %v303
        %v402 = vunpack.c.h.b16 %v303
        %v403 = vunpack.c.l.b16 %v304
        %v404 = vunpack.c.h.b16 %v304
        %v405 = vunpack.c.l.b16 %v305
        %v406 = vunpack.c.h.b16 %v305
        %v407 = vunpack.c.l.b16 %v306
        %v408 = vunpack.c.h.b16 %v306
        %v409 = vunpack.c.l.b16 %v307
        %v410 = vunpack.c.h.b16 %v307
        %v411 = vpack.c.b16 %v349, %v347
        %v412 = vpack.c.b16 %v350, %v348
        %v413 = vpack.c.b16 %v353, %v351
        %v414 = vpack.c.b16 %v354, %v352
        %v415 = vpack.c.b16 %v357, %v355
        %v416 = vpack.c.b16 %v358, %v356
        %v417 = vpack.c.b16 %v361, %v359
        %v418 = vpack.c.b16 %v362, %v360
        %v419 = vpack.c.b16 %v365, %v363
        %v420 = vpack.c.b16 %v366, %v364
        %v421 = vpack.c.b16 %v369, %v367
        %v422 = vpack.c.b16 %v370, %v368
        %v423 = vpack.c.b16 %v373, %v371
        %v424 = vpack.c.b16 %v374, %v372
        %v425 = vpack.c.b16 %v377, %v375
        %v426 = vpack.c.b16 %v378, %v376
        %v427 = vpack.c.b16 %v381, %v379
        %v428 = vpack.c.b16 %v382, %v380
        %v429 = vpack.c.b16 %v385, %v383
        %v430 = vpack.c.b16 %v386, %v384
        %v431 = vpack.c.b16 %v389, %v387
        %v432 = vpack.c.b16 %v390, %v388
        %v433 = vpack.c.b16 %v393, %v391
        %v434 = vpack.c.b16 %v394, %v392
        %v435 = vpack.c.b16 %v397, %v395
        %v436 = vpack.c.b16 %v398, %v396
        %v437 = vpack.c.b16 %v401, %v399
        %v438 = vpack.c.b16 %v402, %v400
        %v439 = vpack.c.b16 %v405, %v403
        %v440 = vpack.c.b16 %v406, %v404
        %v441 = vpack.c.b16 %v409, %v407
        %v442 = vpack.c.b16 %v410, %v408
        %475 = vmatprep.subr.bf16.mxu0 %v426
        %476 = vmatpush1.bf16.msra.mxu0 %v425
        %477 = vmatprep.subr.bf16.mxu0 %v424
        %478 = vmatpush1.bf16.msra.mxu0 %v423
        %479 = vmatprep.subr.bf16.mxu0 %v422
        %480 = vmatpush1.bf16.msra.mxu0 %v421
        %481 = vmatprep.subr.bf16.mxu0 %v420
        %482 = vmatpush1.bf16.msra.mxu0 %v419
        %483 = vmatprep.subr.bf16.mxu0 %v418
        %484 = vmatpush1.bf16.msra.mxu0 %v417
        %485 = vmatprep.subr.bf16.mxu0 %v416
        %486 = vmatpush1.bf16.msra.mxu0 %v415
        %487 = vmatprep.subr.bf16.mxu0 %v414
        %488 = vmatpush1.bf16.msra.mxu0 %v413
        %489 = vmatprep.subr.bf16.mxu0 %v412
        %490 = vmatpush1.bf16.msra.mxu0 %v411
        %491 = vmatprep.subr.bf16.mxu0 %v442
        %492 = vmatpush2.bf16.msra.mxu0 %v441
        %493 = vmatprep.subr.bf16.mxu0 %v440
        %494 = vmatpush2.bf16.msra.mxu0 %v439
        %495 = vmatprep.subr.bf16.mxu0 %v438
        %496 = vmatpush2.bf16.msra.mxu0 %v437
        %497 = vmatprep.subr.bf16.mxu0 %v436
        %498 = vmatpush2.bf16.msra.mxu0 %v435
        %499 = vmatprep.subr.bf16.mxu0 %v434
        %500 = vmatpush2.bf16.msra.mxu0 %v433
        %501 = vmatprep.subr.bf16.mxu0 %v432
        %502 = vmatpush2.bf16.msra.mxu0 %v431
        %503 = vmatprep.subr.bf16.mxu0 %v430
        %504 = vmatpush2.bf16.msra.mxu0 %v429
        %505 = vmatprep.subr.bf16.mxu0 %v428
        %506 = vmatpush2.bf16.msra.mxu0 %v427
        %507 = vmatprep.mubr.bf16.mxu0 %v312
        %508 = vmatmul.mubr.bf16.gmra.mxu0 %v311
        %v509 = vpop.f32.mrf.mxu0
        %v510 = vadd.f32 0.0, %v509
        %v511 = vpop.f32.mrf.mxu0
        %v512 = vadd.f32 0.0, %v511
        %v513 = vpop.f32.mrf.mxu0
        %v514 = vpop.f32.mrf.mxu0
        %515 = vdwg.mxu0
        %v516 = vadd.f32 %v273, %v510
        %v517 = vadd.f32 %v274, %v512
        %518 = vst [vmem:[#allocation2] sm:$0xff] %v516
        %519 = vst [vmem:[#allocation2 + $0x8] sm:$0xff] %v517
        // Predicated region
        $region49: #{tpu_custom_call.1} parent=31 // pred_check
          %p520 = pneg %p267
        $region50: #{tpu_custom_call.1} parent=31 // pred_check_branch
          %522 = sbr.rel (%p520) target = $region52
        $region51: #{tpu_custom_call.1} parent=31 // pred_region
          %v523 = vld [vmem:[#allocation2] sm:$0xff]
          %v524 = vld [vmem:[#allocation2 + $0x8] sm:$0xff]
          %v525 = vld [vmem:[%s234] sm:$0x3]
          %v527 = vlaneseq
          %v528 = vshrl.u32 %v527, 7
          %v529 = vsub.s32 0, %v528
          %v530 = vrot.slane %v525, %v529
          %v531 = vlaneseq
          %v532 = vshrl.u32 %v531, 7
          %v533 = vsub.s32 1, %v532
          %v534 = vrot.slane %v525, %v533
          %v537 = vadd.f32 %v523, %v530
          %v538 = vadd.f32 %v524, %v534
          %v539 = vmax.f32 %v537, 0.0
          %v540 = vmax.f32 %v538, 0.0
          %541 = vst [vmem:[%s261] sm:$0xff] %v539
          %542 = vst [vmem:[%s261 + $0x8] sm:$0xff] %v540
        $region52: #{tpu_custom_call.1} parent=31 // pred_fallthru
          _
        %s543 = sand.u32 %s121, 1
        %s544 = scalar_lea.sflag [#allocation5], %s543
        %s545 = sand.u32 %s121, 1
        %s546 = smul.addr %s545, 16
        %s547 = scalar_lea.vmem [#allocation9], %s546
        // Predicated region
        $region53: #{tpu_custom_call.1} parent=31 // pred_check
          %p548 = pneg %p131
        $region54: #{tpu_custom_call.1} parent=31 // pred_check_branch
          %550 = sbr.rel (%p548) target = $region56
        $region55: #{tpu_custom_call.1} parent=31 // pred_region
          %s551 = smul.u32 2, %s25
          %s553 = ssub.s32 256, 256
          %554 = vsyncadd %s544, %s553
          %s555 = smul.addr %s551, 128
          %s556 = scalar_lea.hbm %s3, %s555
          %s558 = sshll.u32 %s547, 4
          %s559 = int_to_ptr.vmem [resolvable:$true] %s558
          %561 = dma.vmem_to_hbm [thread:$0]  %s559, 256, %s556, %s544
        $region56: #{tpu_custom_call.1} parent=31 // pred_fallthru
          _
      $region32: #{tpu_custom_call.1} parent=5 // pred_fallthru
        _
      %p562 = scmp.le.s32.totalorder 2, %s16
      // Predicated region
      $region57: #{tpu_custom_call.1} parent=5 // pred_check
        %p563 = pneg %p562
      $region58: #{tpu_custom_call.1} parent=5 // pred_check_branch
        %565 = sbr.rel (%p563) target = $region60
      $region59: #{tpu_custom_call.1} parent=5 // pred_region
        %s566 = ssub.s32 %s16, 2
        // Predicated region
        $region61: #{tpu_custom_call.1} parent=59 // pred_check
          %p567 = pneg %p137
        $region62: #{tpu_custom_call.1} parent=59 // pred_check_branch
          %569 = sbr.rel (%p567) target = $region64
        $region63: #{tpu_custom_call.1} parent=59 // pred_region
          %s570 = sand.u32 %s122, 1
          %s571 = scalar_lea.sflag [#allocation5], %s570
          %s572 = sand.u32 %s122, 1
          %s573 = smul.addr %s572, 16
          %s574 = scalar_lea.vmem [#allocation9], %s573
          %575 = dma.done %s571, 256
        $region64: #{tpu_custom_call.1} parent=59 // pred_fallthru
          _
      $region60: #{tpu_custom_call.1} parent=5 // pred_fallthru
        _
    $region6: #{tpu_custom_call.1} parent=1 // loop_footer
      %s20 = sadd.s32 1, %s16
    $region7: #{tpu_custom_call.1} parent=1 // loop_footer_branch
      %15 = sbr.rel target = $region3
    $region8: #{tpu_custom_call.1} parent=1 // loop_exit
      _
    %576 = vsyncpa [#allocation4], 1
    %s577 = scalar_lea.sflag [#allocation4], 1
    %578 = vsyncpa %s577, 1
    %579 = vsyncpa [#allocation7], 1
    %s580 = scalar_lea.sflag [#allocation7], 1
    %581 = vsyncpa %s580, 1
    %582 = vsyncpa [#allocation5], 1
    %s583 = scalar_lea.sflag [#allocation5], 1
    %584 = vsyncpa %s583, 1

</llo_original>
